<compile_context>
chip_gen: v6e
topology: v6e:2x2x1
jax: 0.10.0
libtpu: 0.0.40
codegen_flags: <defaults>
</compile_context>

<pallas_src>
import functools
import numpy as np

import jax
import jax.numpy as jnp
from jax.experimental import pallas as pl
from jax.experimental.pallas import tpu as pltpu


# ----------------------------- tiling helper ------------------------------

def _pick_reduce_tile(dim, target, align=128):
    """Exact-divisor tile for the reduction (K) axis — edge masking is not allowed there.
    Falls back to the full dimension (always correct, possibly VMEM-hungry)."""
    if dim <= target:
        return dim
    for t in range(min(target, dim), align - 1, -1):
        if dim % t == 0 and t % align == 0:
            return t
    return dim


# ------------- Linear kernel (LayerNorm / bias / GELU / residual+scale fused) -------------

def _linear_kernel(*refs, activation, fuse_residual, fuse_ln, ln_eps):
    it = iter(refs)
    x_ref, w_ref, b_ref = next(it), next(it), next(it)
    ln_g_ref = ln_b_ref = r_ref = g_ref = None
    if fuse_ln:
        ln_g_ref, ln_b_ref = next(it), next(it)
    if fuse_residual:
        r_ref, g_ref = next(it), next(it)
    o_ref, acc_ref = next(it), next(it)

    @pl.when(pl.program_id(2) == 0)
    def _():
        acc_ref[...] = jnp.zeros_like(acc_ref)

    x = x_ref[...]
    if fuse_ln:
        # LayerNorm fused into the matmul prologue (tk == full C): saves one (N, C) bf16
        # HBM write + read vs. a standalone LN pallas_call.
        xf = x.astype(jnp.float32)
        mu = jnp.mean(xf, axis=-1, keepdims=True)
        xc = xf - mu
        var = jnp.mean(xc * xc, axis=-1, keepdims=True)
        x = (xc * jax.lax.rsqrt(var + ln_eps) * ln_g_ref[...] + ln_b_ref[...]
             ).astype(jnp.bfloat16)
    acc_ref[...] += jnp.dot(x, w_ref[...], preferred_element_type=jnp.float32)

    @pl.when(pl.program_id(2) == pl.num_programs(2) - 1)
    def _():
        y = acc_ref[...] + b_ref[...].astype(jnp.float32)
        if activation == "gelu":
            y = jax.nn.gelu(y, approximate=False)        # exact erf GELU == nn.GELU()
        if fuse_residual:
            y = r_ref[...].astype(jnp.float32) + g_ref[...].astype(jnp.float32) * y
        o_ref[...] = y.astype(o_ref.dtype)


def linear(x, w, b, *, activation=None, residual=None, scale=None,
           ln_gamma=None, ln_beta=None, ln_eps=1e-5,
           out_dtype=jnp.bfloat16, tile_m=512, tile_n=2048, tile_k=512):
    """y = act(layernorm?(x) @ w + b); optionally fused `residual + scale * y`.

    Matmul operands are bf16 (weights expected pre-cast once — see prepare_params);
    accumulation is f32 in a VMEM scratch; the reduction axis is the innermost grid dim.
    M / N use pl.cdiv grids with Pallas edge masking, so awkward row counts never fall back
    to a whole-array block; K tiles must divide exactly (or use the full K)."""
    n, c = x.shape
    d = w.shape[1]
    fuse_ln = ln_gamma is not None
    fuse_res = residual is not None

    if w.dtype != jnp.bfloat16:
        w = w.astype(jnp.bfloat16)                       # prefer pre-cast weights
    if not fuse_ln and x.dtype != jnp.bfloat16:
        x = x.astype(jnp.bfloat16)

    tm = n if n <= tile_m else tile_m                    # tile_m is a multiple of 8
    tn = d if d <= tile_n else tile_n                    # tile_n is a multiple of 128
    tk = c if fuse_ln else _pick_reduce_tile(c, tile_k)  # LN needs whole rows => tk == C

    in_specs = [
        pl.BlockSpec((tm, tk), lambda m, nn, kk: (m, kk)),
        pl.BlockSpec((tk, tn), lambda m, nn, kk: (kk, nn)),
        pl.BlockSpec((1, tn), lambda m, nn, kk: (0, nn)),
    ]
    args = [x, w, b.reshape(1, d)]
    if fuse_ln:
        in_specs += [pl.BlockSpec((1, tk), lambda m, nn, kk: (0, 0)),
                     pl.BlockSpec((1, tk), lambda m, nn, kk: (0, 0))]
        args += [ln_gamma.reshape(1, c), ln_beta.reshape(1, c)]
    if fuse_res:
        in_specs += [pl.BlockSpec((tm, tn), lambda m, nn, kk: (m, nn)),
                     pl.BlockSpec((1, tn), lambda m, nn, kk: (0, nn))]
        args += [residual, scale.reshape(1, d)]

    return pl.pallas_call(
        functools.partial(_linear_kernel, activation=activation,
                          fuse_residual=fuse_res, fuse_ln=fuse_ln, ln_eps=ln_eps),
        out_shape=jax.ShapeDtypeStruct((n, d), out_dtype),
        grid=(pl.cdiv(n, tm), pl.cdiv(d, tn), c // tk),
        in_specs=in_specs,
        out_specs=pl.BlockSpec((tm, tn), lambda m, nn, kk: (m, nn)),
        scratch_shapes=[pltpu.VMEM((tm, tn), jnp.float32)],
        compiler_params=pltpu.CompilerParams(
            dimension_semantics=("parallel", "parallel", "arbitrary"),
            vmem_limit_bytes=48 * 1024 * 1024),
    )(*args)


# ------------- Neighborhood attention kernel (fused gather, online softmax) -------------

def _nat_attn_kernel(qkv_ref, bias_ref, o_ref, m_scr, den_scr, acc_scr, *,
                     height, width, heads, hd, ks, scale):
    C = heads * hd
    nbh = ks // 2
    P = height * width
    Hm = height - ks + 1            # un-clamped row-window extent
    Wm = width - ks + 1

    # 0/1 per-head segment-sum (C, heads) and head-broadcast (heads, C) matrices from iotas.
    c_ids = jax.lax.broadcasted_iota(jnp.int32, (C, heads), 0)
    h_ids = jax.lax.broadcasted_iota(jnp.int32, (C, heads), 1)
    seg = jnp.where(c_ids // hd == h_ids, 1.0, 0.0).astype(jnp.bfloat16)
    h_ids_t = jax.lax.broadcasted_iota(jnp.int32, (heads, C), 0)
    c_ids_t = jax.lax.broadcasted_iota(jnp.int32, (heads, C), 1)
    seg_t = jnp.where(c_ids_t // hd == h_ids_t, 1.0, 0.0).astype(jnp.bfloat16)

    # online-softmax running state (persists across the dr loop in VMEM scratch)
    m_scr[...] = jnp.full(m_scr.shape, -jnp.inf, jnp.float32)
    den_scr[...] = jnp.zeros(den_scr.shape, jnp.float32)
    acc_scr[...] = jnp.zeros(acc_scr.shape, jnp.float32)

    def row_clamped(dr, c0):
        """(H, W, C) NAT row-window-clamped view for row offset dr, channels [c0, c0+C),
        built straight from the resident qkv block (no HBM duplication, no dc dependence)."""
        mid = qkv_ref[pl.ds(dr, Hm), :, pl.ds(c0, C)]
        if nbh == 0:
            return mid
        top = jnp.broadcast_to(qkv_ref[pl.ds(dr, 1), :, pl.ds(c0, C)], (nbh, width, C))
        bot = jnp.broadcast_to(qkv_ref[pl.ds(dr + Hm - 1, 1), :, pl.ds(c0, C)],
                               (nbh, width, C))
        return jnp.concatenate([top, mid, bot], axis=0)

    def col_clamped(a, dc):
        """(P, C) column-window-clamped view of a row-clamped slab for column offset dc."""
        mid = a[:, dc:dc + Wm, :]
        if nbh == 0:
            return mid.reshape(P, C)
        left = jnp.broadcast_to(a[:, dc:dc + 1, :], (height, nbh, C))
        right = jnp.broadcast_to(a[:, dc + Wm - 1:dc + Wm, :], (height, nbh, C))
        return jnp.concatenate([left, mid, right], axis=1).reshape(P, C)

    @pl.loop(0, ks)                              # bounded unroll: only the dc loop is static
    def _(dr):
        q = qkv_ref[:, :, pl.ds(0, C)].reshape(P, C)
        k_row = row_clamped(dr, C)               # row clamp hoisted: built once per dr
        v_row = row_clamped(dr, 2 * C)
        bias_row = bias_ref[dr]                  # (P, ks*heads) bf16, dynamic leading index
        for dc in range(ks):                     # ks <= 7 -> cheap static unroll
            k_j = col_clamped(k_row, dc)
            v_j = col_clamped(v_row, dc)
            # NOTE(v5e): q*k_j in bf16 is native on v6e/v7x; v5e inserts VPU converts.
            logit = jnp.dot(q * k_j, seg, preferred_element_type=jnp.float32) * scale
            logit = logit + bias_row[:, dc * heads:(dc + 1) * heads].astype(jnp.float32)
            m_old = m_scr[...]
            m_new = jnp.maximum(m_old, logit)
            alpha = jnp.exp(m_old - m_new)       # f32 rescale of the running stats
            e = jnp.exp(logit - m_new)
            den_scr[...] = den_scr[...] * alpha + e
            # Broadcast alpha (P,heads)->(P,C) exactly via a hi/lo bf16 split so repeated
            # rescales do not compound bf16 rounding in the accumulator.
            a_hi = alpha.astype(jnp.bfloat16)
            a_lo = (alpha - a_hi.astype(jnp.float32)).astype(jnp.bfloat16)
            a_b = (jnp.dot(a_hi, seg_t, preferred_element_type=jnp.float32)
                   + jnp.dot(a_lo, seg_t, preferred_element_type=jnp.float32))
            e_b = jnp.dot(e.astype(jnp.bfloat16), seg_t,
                          preferred_element_type=jnp.float32)  # probs quantized to bf16
            acc_scr[...] = acc_scr[...] * a_b + e_b * v_j.astype(jnp.float32)
            m_scr[...] = m_new

    den_b = jnp.dot(den_scr[...].astype(jnp.bfloat16), seg_t,
                    preferred_element_type=jnp.float32)
    out = acc_scr[...] * pl.reciprocal(den_b, approx=True)
    o_ref[...] = out.reshape(height, width, C).astype(o_ref.dtype)


def nat_attention(qkv, bias_packed, *, heads, kernel_size):
    """qkv: (B, H, W, 3C) bf16, channels [q|k|v] head-major.
    bias_packed: (ks, H*W, ks*heads) bf16.  Returns (B, H, W, C) bf16 (proj-ready layout)."""
    B, height, width, c3 = qkv.shape
    C = c3 // 3
    hd = C // heads
    P = height * width
    ks = kernel_size
    # TODO(synk): for very large H*W (>~4k positions) add a row-band P tiling (query band +
    # (ks-1)-row halo) as a second parallel grid axis so the working set stays within v7x's
    # 64 MiB VMEM and both of its TensorCores get work even when B == 1.
    # TODO(synk): when C < 128 (e.g. a dim-64 first stage) present a lane-dense (H, W*C)
    # output layout to avoid masked narrow stores.
    return pl.pallas_call(
        functools.partial(_nat_attn_kernel, height=height, width=width,
                          heads=heads, hd=hd, ks=ks, scale=hd ** -0.5),
        out_shape=jax.ShapeDtypeStruct((B, height, width, C), jnp.bfloat16),
        grid=(B,),
        in_specs=[
            pl.BlockSpec((None, height, width, c3), lambda b: (b, 0, 0, 0)),
            pl.BlockSpec((ks, P, ks * heads), lambda b: (0, 0, 0)),   # resident across batch
        ],
        out_specs=pl.BlockSpec((None, height, width, C), lambda b: (b, 0, 0, 0)),
        scratch_shapes=[pltpu.VMEM((P, heads), jnp.float32),    # running max
                        pltpu.VMEM((P, heads), jnp.float32),    # running denominator
                        pltpu.VMEM((P, C), jnp.float32)],       # running weighted-V acc
        compiler_params=pltpu.CompilerParams(
            dimension_semantics=("parallel",),
            # A 56x56 stage's working set (~35-40 MiB) exceeds the 16/32 MiB scoped VMEM
            # defaults; 48 MiB fits every generation's physical VMEM with headroom.
            vmem_limit_bytes=48 * 1024 * 1024),
    )(qkv, bias_packed)


# ----------------------------- NAT indices / packed bias / param prep ----------------------

def _nat_indices(length, kernel_size):
    """Clamped neighborhood window starts + relative-position-bias starts (NATTEN, dilation=1)."""
    nbh = kernel_size // 2
    idx = np.arange(length)
    start = np.clip(idx - nbh, 0, length - kernel_size)
    win = start[:, None] + np.arange(kernel_size)[None, :]
    pb = (nbh
          + np.where(idx < nbh, nbh - idx, 0)
          + np.where(idx + nbh >= length, length - idx - 1 - nbh, 0))
    pb_win = pb[:, None] + np.arange(kernel_size)[None, :]
    return win, pb_win


def _nat_bias_packed(rpb, height, width, kernel_size):
    """rpb (heads, 2k-1, 2k-1) -> (k, H*W, k*heads); element [dr, r*W+c, dc*heads + h]."""
    _, pb_row = _nat_indices(height, kernel_size)
    _, pb_col = _nat_indices(width, kernel_size)
    b = rpb[:, pb_row[:, :, None, None], pb_col[None, None, :, :]]   # (heads, H, k, W, k)
    b = jnp.transpose(b, (2, 1, 3, 4, 0))                            # (dr, H, W, dc, heads)
    return b.reshape(kernel_size, height * width,
                     kernel_size * rpb.shape[0])


def prepare_params(raw, cfg, height, width):
    """One-time device-side preparation: bf16 weight pre-cast + packed bf16 NAT bias.
    Avoids a per-forward f32->bf16 pass over every weight and a per-forward bias gather."""
    p = dict(raw)
    for name in ("qkv_w", "proj_w", "fc1_w", "fc2_w"):
        p[name] = raw[name].astype(jnp.bfloat16)
    p["nat_bias"] = _nat_bias_packed(raw["rpb"], height, width,
                                     cfg["kernel_size"]).astype(jnp.bfloat16)
    return p


# ----------------------------- NATLayer forward ------------------------------

def nat_layer_forward(x, params, cfg):
    """x: (B, H, W, C) f32.  params: output of prepare_params().  Eval-mode forward."""
    B, height, width, C = x.shape
    heads = cfg["num_heads"]
    ks = cfg["kernel_size"]
    assert C % heads == 0
    assert ks % 2 == 1 and ks <= height and ks <= width
    N = B * height * width

    xf = x.reshape(N, C)                                              # f32 residual stream

    # attention branch: (norm1 fused into qkv) -> fused-gather NAT -> proj (+res, gamma1)
    qkv = linear(xf, params["qkv_w"], params["qkv_b"],
                 ln_gamma=params["norm1_g"], ln_beta=params["norm1_b"])   # (N, 3C) bf16
    attn = nat_attention(qkv.reshape(B, height, width, 3 * C),
                         params["nat_bias"], heads=heads, kernel_size=ks)
    xf = linear(attn.reshape(N, C), params["proj_w"], params["proj_b"],
                residual=xf, scale=params["gamma1"], out_dtype=jnp.float32)

    # MLP branch: (norm2 fused into fc1) -> exact GELU -> fc2 (+res, gamma2)
    m1 = linear(xf, params["fc1_w"], params["fc1_b"], activation="gelu",
                ln_gamma=params["norm2_g"], ln_beta=params["norm2_b"])
    xf = linear(m1, params["fc2_w"], params["fc2_b"],
                residual=xf, scale=params["gamma2"], out_dtype=jnp.float32)
    # TODO(synk): DropPath / Dropout are identity in eval mode and are intentionally omitted.
    return xf.reshape(B, height, width, C)


# ----------------------------- Pure-f32 JAX reference (PyTorch semantics) -------------------

def _ln_ref(x, g, b, eps=1e-5):
    mu = jnp.mean(x, axis=-1, keepdims=True)
    xc = x - mu
    var = jnp.mean(xc * xc, axis=-1, keepdims=True)
    return xc * jax.lax.rsqrt(var + eps) * g + b


def _lin_ref(x, w, b, activation=None):
    y = x @ w + b
    if activation == "gelu":
        y = jax.nn.gelu(y, approximate=False)
    return y


def _gather_neighbors_ref(t, row_win, col_win):
    g = t[:, :, row_win, :, :]                       # (B, heads, H, k, W, hd)
    g = g[:, :, :, :, col_win, :]                    # (B, heads, H, k, W, k, hd)
    return jnp.transpose(g, (0, 1, 2, 4, 3, 5, 6))   # (B, heads, H, W, k, k, hd)


def nat_layer_reference(x, params, cfg):
    B, H, W, C = x.shape
    heads = cfg["num_heads"]
    ks = cfg["kernel_size"]
    hd = C // heads
    kk = ks * ks
    scale = hd ** -0.5
    N = B * H * W
    P = H * W

    xf = x.reshape(N, C)
    shortcut = xf
    h = _ln_ref(xf, params["norm1_g"], params["norm1_b"])
    qkv = _lin_ref(h, params["qkv_w"], params["qkv_b"]).reshape(B, H, W, 3, heads, hd)
    qkv = jnp.transpose(qkv, (3, 0, 4, 1, 2, 5))
    q, k, v = qkv[0] * scale, qkv[1], qkv[2]

    row_win, pb_row = _nat_indices(H, ks)
    col_win, pb_col = _nat_indices(W, ks)
    k_nbr = _gather_neighbors_ref(k, row_win, col_win).reshape(B * heads, P, kk, hd)
    v_nbr = _gather_neighbors_ref(v, row_win, col_win).reshape(B * heads, P, kk, hd)

    rpb = params["rpb"]
    bias = rpb[:, pb_row[:, :, None, None], pb_col[None, None, :, :]]
    bias = jnp.transpose(bias, (0, 1, 3, 2, 4)).reshape(heads, P, kk)
    bias = jnp.broadcast_to(bias[None], (B, heads, P, kk)).reshape(B * heads, P, kk)

    qf = q.reshape(B * heads, P, hd)
    attn = jnp.sum(qf[:, :, None, :] * k_nbr, axis=-1) + bias
    attn = jax.nn.softmax(attn, axis=-1)
    o = jnp.sum(attn[..., None] * v_nbr, axis=2)
    o = o.reshape(B, heads, H, W, hd)
    o = jnp.transpose(o, (0, 2, 3, 1, 4)).reshape(N, C)
    a = _lin_ref(o, params["proj_w"], params["proj_b"])
    xf = shortcut + params["gamma1"][None, :] * a

    h2 = _ln_ref(xf, params["norm2_g"], params["norm2_b"])
    m = _lin_ref(h2, params["fc1_w"], params["fc1_b"], activation="gelu")
    m = _lin_ref(m, params["fc2_w"], params["fc2_b"])
    xf = xf + params["gamma2"][None, :] * m
    return xf.reshape(B, H, W, C)


# ----------------------------- Deterministic parameter init ------------------------------

def init_params(key, dim, num_heads, kernel_size, mlp_ratio=4.0, layer_scale=1e-5):
    hidden = int(dim * mlp_ratio)
    ks = jax.random.split(key, 9)
    std = 0.02

    def nrm(k, shape):
        return std * jax.random.normal(k, shape, jnp.float32)

    return {
        "norm1_g": jnp.ones((dim,), jnp.float32),
        "norm1_b": jnp.zeros((dim,), jnp.float32),
        "qkv_w": nrm(ks[0], (dim, 3 * dim)),
        "qkv_b": nrm(ks[1], (3 * dim,)),
        "rpb": nrm(ks[2], (num_heads, 2 * kernel_size - 1, 2 * kernel_size - 1)),
        "proj_w": nrm(ks[3], (dim, dim)),
        "proj_b": nrm(ks[4], (dim,)),
        "norm2_g": jnp.ones((dim,), jnp.float32),
        "norm2_b": jnp.zeros((dim,), jnp.float32),
        "fc1_w": nrm(ks[5], (dim, hidden)),
        "fc1_b": nrm(ks[6], (hidden,)),
        "fc2_w": nrm(ks[7], (hidden, dim)),
        "fc2_b": nrm(ks[8], (dim,)),
        "gamma1": layer_scale * jnp.ones((dim,), jnp.float32),
        "gamma2": layer_scale * jnp.ones((dim,), jnp.float32),
    }


if __name__ == "__main__":
    B, height, width, C = 2, 8, 8, 32
    num_heads, kernel_size = 2, 3
    cfg = {"num_heads": num_heads, "kernel_size": kernel_size}

    key = jax.random.PRNGKey(0)
    kx, kp = jax.random.split(key)
    x = jax.random.normal(kx, (B, height, width, C), jnp.float32)

    # Module-default configuration (layer_scale = 1e-5).
    params = init_params(kp, C, num_heads, kernel_size, layer_scale=1e-5)
    prepped = prepare_params(params, cfg, height, width)
    out = jax.block_until_ready(nat_layer_forward(x, prepped, cfg))
    ref = nat_layer_reference(x, params, cfg)
    np.testing.assert_allclose(np.asarray(out), np.asarray(ref), rtol=1e-3, atol=1e-4)

    # layer_scale = 1.0 genuinely exercises the attention / MLP math against the pure-f32
    # reference (looser tolerance: matmul operands / softmax probs are bf16 by design).
    params_ls1 = init_params(kp, C, num_heads, kernel_size, layer_scale=1.0)
    prepped_ls1 = prepare_params(params_ls1, cfg, height, width)
    out1 = jax.block_until_ready(nat_layer_forward(x, prepped_ls1, cfg))
    ref1 = nat_layer_reference(x, params_ls1, cfg)
    np.testing.assert_allclose(np.asarray(out1), np.asarray(ref1), rtol=5e-2, atol=1e-2)

    print("KERNEL_OK")
</pallas_src>

<mosaic_0001>
module attributes {stable_mosaic.version = 11 : i64} {
  func.func @_linear_kernel(%arg0: i32, %arg1: i32, %arg2: i32, %arg3: memref<128x32xf32, #tpu.memory_space<vmem>>, %arg4: memref<32x96xbf16, #tpu.memory_space<vmem>>, %arg5: memref<1x96xf32, #tpu.memory_space<vmem>>, %arg6: memref<1x32xf32, #tpu.memory_space<vmem>>, %arg7: memref<1x32xf32, #tpu.memory_space<vmem>>, %arg8: memref<128x96xbf16, #tpu.memory_space<vmem>>, %arg9: memref<128x96xf32, #tpu.memory_space<vmem>>) attributes {dimension_semantics = [#tpu.dimension_semantics<parallel>, #tpu.dimension_semantics<parallel>, #tpu.dimension_semantics<arbitrary>], iteration_bounds = array<i64: 1, 1, 1>, scalar_prefetch = 0 : i64, scratch_operands = 1 : i64, tpu.core_type = #tpu.core_type<tc>, window_params = [{transform_indices = @transform_0, window_bounds = array<i64: 128, 32>}, {transform_indices = @transform_1, window_bounds = array<i64: 32, 96>}, {transform_indices = @transform_2, window_bounds = array<i64: 1, 96>}, {pipeline_mode = #tpu.pipeline_mode<synchronous>, transform_indices = @transform_3, window_bounds = array<i64: 1, 32>}, {pipeline_mode = #tpu.pipeline_mode<synchronous>, transform_indices = @transform_4, window_bounds = array<i64: 1, 32>}, {transform_indices = @transform_5, window_bounds = array<i64: 128, 96>}]} {
    %c0_i32 = arith.constant 0 : i32
    %0 = arith.cmpi eq, %arg2, %c0_i32 : i32
    %1 = arith.extui %0 : i1 to i32
    %c0_i32_0 = arith.constant 0 : i32
    %2 = arith.cmpi ne, %1, %c0_i32_0 : i32
    scf.if %2 {
      %cst_19 = arith.constant 0.000000e+00 : f32
      %35 = vector.broadcast %cst_19 : f32 to vector<128x96xf32>
      %c0_20 = arith.constant 0 : index
      %c0_21 = arith.constant 0 : index
      %36 = vector.load %arg9[%c0_20, %c0_21] : memref<128x96xf32, #tpu.memory_space<vmem>>, vector<128x96xf32>
      tpu.vector_store %arg9[%c0_20, %c0_21], %35 {strides = array<i32>} : memref<128x96xf32, #tpu.memory_space<vmem>>, vector<128x96xf32>,
    } else {
    }
    %c0 = arith.constant 0 : index
    %c0_1 = arith.constant 0 : index
    %3 = vector.load %arg3[%c0, %c0_1] : memref<128x32xf32, #tpu.memory_space<vmem>>, vector<128x32xf32>
    %cst = arith.constant dense<0.000000e+00> : vector<128xf32>
    %4 = vector.multi_reduction <add>, %3, %cst [1] : vector<128x32xf32> to vector<128xf32>
    %5 = vector.shape_cast %4 : vector<128xf32> to vector<128x1xf32>
    %cst_2 = arith.constant 3.200000e+01 : f32
    %6 = vector.broadcast %cst_2 : f32 to vector<128x1xf32>
    %7 = arith.divf %5, %6 : vector<128x1xf32>
    %8 = vector.broadcast %7 : vector<128x1xf32> to vector<128x32xf32>
    %9 = arith.subf %3, %8 : vector<128x32xf32>
    %10 = arith.mulf %9, %9 : vector<128x32xf32>
    %cst_3 = arith.constant dense<0.000000e+00> : vector<128xf32>
    %11 = vector.multi_reduction <add>, %10, %cst_3 [1] : vector<128x32xf32> to vector<128xf32>
    %12 = vector.shape_cast %11 : vector<128xf32> to vector<128x1xf32>
    %cst_4 = arith.constant 3.200000e+01 : f32
    %13 = vector.broadcast %cst_4 : f32 to vector<128x1xf32>
    %14 = arith.divf %12, %13 : vector<128x1xf32>
    %cst_5 = arith.constant 9.99999974E-6 : f32
    %15 = vector.broadcast %cst_5 : f32 to vector<128x1xf32>
    %16 = arith.addf %14, %15 : vector<128x1xf32>
    %17 = math.rsqrt %16 : vector<128x1xf32>
    %18 = vector.broadcast %17 : vector<128x1xf32> to vector<128x32xf32>
    %19 = arith.mulf %9, %18 : vector<128x32xf32>
    %c0_6 = arith.constant 0 : index
    %c0_7 = arith.constant 0 : index
    %20 = vector.load %arg6[%c0_6, %c0_7] : memref<1x32xf32, #tpu.memory_space<vmem>>, vector<1x32xf32>
    %21 = vector.broadcast %20 : vector<1x32xf32> to vector<128x32xf32>
    %22 = arith.mulf %19, %21 : vector<128x32xf32>
    %c0_8 = arith.constant 0 : index
    %c0_9 = arith.constant 0 : index
    %23 = vector.load %arg7[%c0_8, %c0_9] : memref<1x32xf32, #tpu.memory_space<vmem>>, vector<1x32xf32>
    %24 = vector.broadcast %23 : vector<1x32xf32> to vector<128x32xf32>
    %25 = arith.addf %22, %24 : vector<128x32xf32>
    %26 = arith.truncf %25 : vector<128x32xf32> to vector<128x32xbf16>
    %c0_10 = arith.constant 0 : index
    %c0_11 = arith.constant 0 : index
    %27 = vector.load %arg9[%c0_10, %c0_11] : memref<128x96xf32, #tpu.memory_space<vmem>>, vector<128x96xf32>
    %c0_12 = arith.constant 0 : index
    %c0_13 = arith.constant 0 : index
    %28 = vector.load %arg4[%c0_12, %c0_13] : memref<32x96xbf16, #tpu.memory_space<vmem>>, vector<32x96xbf16>
    %cst_14 = arith.constant dense<0.000000e+00> : vector<128x96xf32>
    %29 = tpu.matmul %26, %28, %cst_14 {dimension_numbers = #tpu.dot_dimension_numbers<[1], [0], [0], [1], [0, 0, 1, 1], [], []>} : vector<128x32xbf16>, vector<32x96xbf16>, vector<128x96xf32> -> vector<128x96xf32>
    %30 = arith.addf %27, %29 : vector<128x96xf32>
    %c0_15 = arith.constant 0 : index
    %c0_16 = arith.constant 0 : index
    %31 = vector.load %arg9[%c0_15, %c0_16] : memref<128x96xf32, #tpu.memory_space<vmem>>, vector<128x96xf32>
    tpu.vector_store %arg9[%c0_15, %c0_16], %30 {strides = array<i32>} : memref<128x96xf32, #tpu.memory_space<vmem>>, vector<128x96xf32>,
    %c0_i32_17 = arith.constant 0 : i32
    %32 = arith.cmpi eq, %arg2, %c0_i32_17 : i32
    %33 = arith.extui %32 : i1 to i32
    %c0_i32_18 = arith.constant 0 : i32
    %34 = arith.cmpi ne, %33, %c0_i32_18 : i32
    scf.if %34 {
      %c0_19 = arith.constant 0 : index
      %c0_20 = arith.constant 0 : index
      %35 = vector.load %arg9[%c0_19, %c0_20] : memref<128x96xf32, #tpu.memory_space<vmem>>, vector<128x96xf32>
      %c0_21 = arith.constant 0 : index
      %c0_22 = arith.constant 0 : index
      %36 = vector.load %arg5[%c0_21, %c0_22] : memref<1x96xf32, #tpu.memory_space<vmem>>, vector<1x96xf32>
      %37 = vector.broadcast %36 : vector<1x96xf32> to vector<128x96xf32>
      %38 = arith.addf %35, %37 : vector<128x96xf32>
      %39 = arith.truncf %38 : vector<128x96xf32> to vector<128x96xbf16>
      %c0_23 = arith.constant 0 : index
      %c0_24 = arith.constant 0 : index
      %40 = vector.load %arg8[%c0_23, %c0_24] : memref<128x96xbf16, #tpu.memory_space<vmem>>, vector<128x96xbf16>
      tpu.vector_store %arg8[%c0_23, %c0_24], %39 {strides = array<i32>} : memref<128x96xbf16, #tpu.memory_space<vmem>>, vector<128x96xbf16>,
    } else {
    }
    return
  }
  func.func @transform_0(%arg0: i32, %arg1: i32, %arg2: i32) -> (i32, i32) {
    %c0_i32 = arith.constant 0 : i32
    return %arg0, %arg2 : i32, i32
  }
  func.func @transform_1(%arg0: i32, %arg1: i32, %arg2: i32) -> (i32, i32) {
    %c0_i32 = arith.constant 0 : i32
    return %arg2, %arg1 : i32, i32
  }
  func.func @transform_2(%arg0: i32, %arg1: i32, %arg2: i32) -> (i32, i32) {
    %c0_i32 = arith.constant 0 : i32
    %c0_i32_0 = arith.constant 0 : i32
    return %c0_i32, %arg1 : i32, i32
  }
  func.func @transform_3(%arg0: i32, %arg1: i32, %arg2: i32) -> (i32, i32) {
    %c0_i32 = arith.constant 0 : i32
    %c0_i32_0 = arith.constant 0 : i32
    %c0_i32_1 = arith.constant 0 : i32
    return %c0_i32, %c0_i32_0 : i32, i32
  }
  func.func @transform_4(%arg0: i32, %arg1: i32, %arg2: i32) -> (i32, i32) {
    %c0_i32 = arith.constant 0 : i32
    %c0_i32_0 = arith.constant 0 : i32
    %c0_i32_1 = arith.constant 0 : i32
    return %c0_i32, %c0_i32_0 : i32, i32
  }
  func.func @transform_5(%arg0: i32, %arg1: i32, %arg2: i32) -> (i32, i32) {
    %c0_i32 = arith.constant 0 : i32
    return %arg0, %arg1 : i32, i32
  }
}

</mosaic_0001>

<llo_original>
// kernel: tpu_custom_call.1
$region0: #{tpu_custom_call.1}
  #allocation0 [shape = 'u32[]', space=smem, size = 0x4, offset = 0x4, fixed_abs, tag = 'smem constant byte address 0x4 - core index']
  #allocation1 [shape = 'u32[144,128]{1,0:T(1,128)}', space=vmem, size = 0x12000, scoped, tag = 'internal scratch']
  #allocation2 [shape = 'f32[128,96]{1,0:T(8,128)}', space=vmem, size = 0x10000, scoped, tag = 'scratch operand']
  %s0 = inlined_call_operand.vmem [shape: f32[128,32], index: 0, kind: input, shape index: {}]
  %s1 = inlined_call_operand.vmem [shape: bf16[32,96], index: 1, kind: input, shape index: {}]
  %s2 = inlined_call_operand.vmem [shape: f32[1,96], index: 2, kind: input, shape index: {}]
  %s3 = inlined_call_operand.vmem [shape: f32[1,32], index: 3, kind: input, shape index: {}]
  %s4 = inlined_call_operand.vmem [shape: f32[1,32], index: 4, kind: input, shape index: {}]
  %s5 = inlined_call_operand.vmem [shape: bf16[128,96], index: 5, kind: output, shape index: {}]
  %s6 = sld [smem:[#allocation0]]
  $region38: #{tpu_custom_call.1} parent=0
    _
  %s8 = ssub.s32 1, %s6
  %s9 = scalar_select 0, %s8, %s6
  // Predicated region
  $region2: #{tpu_custom_call.1} parent=0 // pred_check
    _
  $region3: #{tpu_custom_call.1} parent=0 // pred_check_branch
    %11 = sbr.rel (0) target = $region5
  $region4: #{tpu_custom_call.1} parent=0 // pred_region
    _
  $region5: #{tpu_custom_call.1} parent=0 // pred_fallthru
    _
  // Predicated region
  $region6: #{tpu_custom_call.1} parent=0 // pred_check
    _
  $region7: #{tpu_custom_call.1} parent=0 // pred_check_branch
    %13 = sbr.rel (0) target = $region9
  $region8: #{tpu_custom_call.1} parent=0 // pred_region
    _
  $region9: #{tpu_custom_call.1} parent=0 // pred_fallthru
    _
  // Predicated region
  $region10: #{tpu_custom_call.1} parent=0 // pred_check
    _
  $region11: #{tpu_custom_call.1} parent=0 // pred_check_branch
    %15 = sbr.rel (0) target = $region13
  $region12: #{tpu_custom_call.1} parent=0 // pred_region
    _
  $region13: #{tpu_custom_call.1} parent=0 // pred_fallthru
    _
  // Predicated region
  $region14: #{tpu_custom_call.1} parent=0 // pred_check
    _
  $region15: #{tpu_custom_call.1} parent=0 // pred_check_branch
    %17 = sbr.rel (0) target = $region17
  $region16: #{tpu_custom_call.1} parent=0 // pred_region
    _
  $region17: #{tpu_custom_call.1} parent=0 // pred_fallthru
    _
  // Predicated region
  $region18: #{tpu_custom_call.1} parent=0 // pred_check
    _
  $region19: #{tpu_custom_call.1} parent=0 // pred_check_branch
    %19 = sbr.rel (0) target = $region21
  $region20: #{tpu_custom_call.1} parent=0 // pred_region
    _
  $region21: #{tpu_custom_call.1} parent=0 // pred_fallthru
    _
  %p21 = scmp.eq.s32.totalorder 0, 0
  // Predicated region
  $region22: #{tpu_custom_call.1} parent=0 // pred_check
    %p22 = pneg %p21
  $region23: #{tpu_custom_call.1} parent=0 // pred_check_branch
    %24 = sbr.rel (%p22) target = $region25
  $region24: #{tpu_custom_call.1} parent=0 // pred_region
    %vm25 = vcmask 785408
    %26 = vst.msk [vmem:[#allocation2] sm:$0xff] %vm25, 0.0
    %27 = vst.msk [vmem:[#allocation2 + $0x8] sm:$0xff] %vm25, 0.0
    %28 = vst.msk [vmem:[#allocation2 + $0x10] sm:$0xff] %vm25, 0.0
    %29 = vst.msk [vmem:[#allocation2 + $0x18] sm:$0xff] %vm25, 0.0
    %30 = vst.msk [vmem:[#allocation2 + $0x20] sm:$0xff] %vm25, 0.0
    %31 = vst.msk [vmem:[#allocation2 + $0x28] sm:$0xff] %vm25, 0.0
    %32 = vst.msk [vmem:[#allocation2 + $0x30] sm:$0xff] %vm25, 0.0
    %33 = vst.msk [vmem:[#allocation2 + $0x38] sm:$0xff] %vm25, 0.0
    %34 = vst.msk [vmem:[#allocation2 + $0x40] sm:$0xff] %vm25, 0.0
    %35 = vst.msk [vmem:[#allocation2 + $0x48] sm:$0xff] %vm25, 0.0
    %36 = vst.msk [vmem:[#allocation2 + $0x50] sm:$0xff] %vm25, 0.0
    %37 = vst.msk [vmem:[#allocation2 + $0x58] sm:$0xff] %vm25, 0.0
    %38 = vst.msk [vmem:[#allocation2 + $0x60] sm:$0xff] %vm25, 0.0
    %39 = vst.msk [vmem:[#allocation2 + $0x68] sm:$0xff] %vm25, 0.0
    %40 = vst.msk [vmem:[#allocation2 + $0x70] sm:$0xff] %vm25, 0.0
    %41 = vst.msk [vmem:[#allocation2 + $0x78] sm:$0xff] %vm25, 0.0
  $region25: #{tpu_custom_call.1} parent=0 // pred_fallthru
    _
  %v42 = vld [vmem:[%s0] sm:$0xff]
  %v43 = vld [vmem:[%s0 + $0x8] sm:$0xff]
  %v44 = vld [vmem:[%s0 + $0x10] sm:$0xff]
  %v45 = vld [vmem:[%s0 + $0x18] sm:$0xff]
  %v46 = vld [vmem:[%s0 + $0x20] sm:$0xff]
  %v47 = vld [vmem:[%s0 + $0x28] sm:$0xff]
  %v48 = vld [vmem:[%s0 + $0x30] sm:$0xff]
  %v49 = vld [vmem:[%s0 + $0x38] sm:$0xff]
  %v50 = vld [vmem:[%s0 + $0x40] sm:$0xff]
  %v51 = vld [vmem:[%s0 + $0x48] sm:$0xff]
  %v52 = vld [vmem:[%s0 + $0x50] sm:$0xff]
  %v53 = vld [vmem:[%s0 + $0x58] sm:$0xff]
  %v54 = vld [vmem:[%s0 + $0x60] sm:$0xff]
  %v55 = vld [vmem:[%s0 + $0x68] sm:$0xff]
  %v56 = vld [vmem:[%s0 + $0x70] sm:$0xff]
  %v57 = vld [vmem:[%s0 + $0x78] sm:$0xff]
  %vm58 = vcmask 261120
  %v59 = vsel %vm58, %v42, 0.0
  %60 = vadd.xlane.f32.xlu0 %v59
  %v61 = vpop.xlane.xlu0 %60
  %v62 = vsel %vm58, %v43, 0.0
  %63 = vadd.xlane.f32.xlu0 %v62
  %v64 = vpop.xlane.xlu0 %63
  %v65 = vsel %vm58, %v44, 0.0
  %66 = vadd.xlane.f32.xlu0 %v65
  %v67 = vpop.xlane.xlu0 %66
  %v68 = vsel %vm58, %v45, 0.0
  %69 = vadd.xlane.f32.xlu0 %v68
  %v70 = vpop.xlane.xlu0 %69
  %v71 = vsel %vm58, %v46, 0.0
  %72 = vadd.xlane.f32.xlu0 %v71
  %v73 = vpop.xlane.xlu0 %72
  %v74 = vsel %vm58, %v47, 0.0
  %75 = vadd.xlane.f32.xlu0 %v74
  %v76 = vpop.xlane.xlu0 %75
  %v77 = vsel %vm58, %v48, 0.0
  %78 = vadd.xlane.f32.xlu0 %v77
  %v79 = vpop.xlane.xlu0 %78
  %v80 = vsel %vm58, %v49, 0.0
  %81 = vadd.xlane.f32.xlu0 %v80
  %v82 = vpop.xlane.xlu0 %81
  %v83 = vsel %vm58, %v50, 0.0
  %84 = vadd.xlane.f32.xlu0 %v83
  %v85 = vpop.xlane.xlu0 %84
  %v86 = vsel %vm58, %v51, 0.0
  %87 = vadd.xlane.f32.xlu0 %v86
  %v88 = vpop.xlane.xlu0 %87
  %v89 = vsel %vm58, %v52, 0.0
  %90 = vadd.xlane.f32.xlu0 %v89
  %v91 = vpop.xlane.xlu0 %90
  %v92 = vsel %vm58, %v53, 0.0
  %93 = vadd.xlane.f32.xlu0 %v92
  %v94 = vpop.xlane.xlu0 %93
  %v95 = vsel %vm58, %v54, 0.0
  %96 = vadd.xlane.f32.xlu0 %v95
  %v97 = vpop.xlane.xlu0 %96
  %v98 = vsel %vm58, %v55, 0.0
  %99 = vadd.xlane.f32.xlu0 %v98
  %v100 = vpop.xlane.xlu0 %99
  %v101 = vsel %vm58, %v56, 0.0
  %102 = vadd.xlane.f32.xlu0 %v101
  %v103 = vpop.xlane.xlu0 %102
  %v104 = vsel %vm58, %v57, 0.0
  %105 = vadd.xlane.f32.xlu0 %v104
  %v106 = vpop.xlane.xlu0 %105
  %v107 = vrcp.pop 32.0
  %v108 = vmul.f32 %v61, %v107
  %v109 = vmul.f32 %v64, %v107
  %v110 = vmul.f32 %v67, %v107
  %v111 = vmul.f32 %v70, %v107
  %v112 = vmul.f32 %v73, %v107
  %v113 = vmul.f32 %v76, %v107
  %v114 = vmul.f32 %v79, %v107
  %v115 = vmul.f32 %v82, %v107
  %v116 = vmul.f32 %v85, %v107
  %v117 = vmul.f32 %v88, %v107
  %v118 = vmul.f32 %v91, %v107
  %v119 = vmul.f32 %v94, %v107
  %v120 = vmul.f32 %v97, %v107
  %v121 = vmul.f32 %v100, %v107
  %v122 = vmul.f32 %v103, %v107
  %v123 = vmul.f32 %v106, %v107
  %v124 = vsub.f32 %v42, %v108
  %v125 = vsub.f32 %v43, %v109
  %v126 = vsub.f32 %v44, %v110
  %v127 = vsub.f32 %v45, %v111
  %v128 = vsub.f32 %v46, %v112
  %v129 = vsub.f32 %v47, %v113
  %v130 = vsub.f32 %v48, %v114
  %v131 = vsub.f32 %v49, %v115
  %v132 = vsub.f32 %v50, %v116
  %v133 = vsub.f32 %v51, %v117
  %v134 = vsub.f32 %v52, %v118
  %v135 = vsub.f32 %v53, %v119
  %v136 = vsub.f32 %v54, %v120
  %v137 = vsub.f32 %v55, %v121
  %v138 = vsub.f32 %v56, %v122
  %v139 = vsub.f32 %v57, %v123
  %v140 = vmul.f32 %v124, %v124
  %v141 = vmul.f32 %v125, %v125
  %v142 = vmul.f32 %v126, %v126
  %v143 = vmul.f32 %v127, %v127
  %v144 = vmul.f32 %v128, %v128
  %v145 = vmul.f32 %v129, %v129
  %v146 = vmul.f32 %v130, %v130
  %v147 = vmul.f32 %v131, %v131
  %v148 = vmul.f32 %v132, %v132
  %v149 = vmul.f32 %v133, %v133
  %v150 = vmul.f32 %v134, %v134
  %v151 = vmul.f32 %v135, %v135
  %v152 = vmul.f32 %v136, %v136
  %v153 = vmul.f32 %v137, %v137
  %v154 = vmul.f32 %v138, %v138
  %v155 = vmul.f32 %v139, %v139
  %v156 = vsel %vm58, %v140, 0.0
  %157 = vadd.xlane.f32.xlu0 %v156
  %v158 = vpop.xlane.xlu0 %157
  %v159 = vsel %vm58, %v141, 0.0
  %160 = vadd.xlane.f32.xlu0 %v159
  %v161 = vpop.xlane.xlu0 %160
  %v162 = vsel %vm58, %v142, 0.0
  %163 = vadd.xlane.f32.xlu0 %v162
  %v164 = vpop.xlane.xlu0 %163
  %v165 = vsel %vm58, %v143, 0.0
  %166 = vadd.xlane.f32.xlu0 %v165
  %v167 = vpop.xlane.xlu0 %166
  %v168 = vsel %vm58, %v144, 0.0
  %169 = vadd.xlane.f32.xlu0 %v168
  %v170 = vpop.xlane.xlu0 %169
  %v171 = vsel %vm58, %v145, 0.0
  %172 = vadd.xlane.f32.xlu0 %v171
  %v173 = vpop.xlane.xlu0 %172
  %v174 = vsel %vm58, %v146, 0.0
  %175 = vadd.xlane.f32.xlu0 %v174
  %v176 = vpop.xlane.xlu0 %175
  %v177 = vsel %vm58, %v147, 0.0
  %178 = vadd.xlane.f32.xlu0 %v177
  %v179 = vpop.xlane.xlu0 %178
  %v180 = vsel %vm58, %v148, 0.0
  %181 = vadd.xlane.f32.xlu0 %v180
  %v182 = vpop.xlane.xlu0 %181
  %v183 = vsel %vm58, %v149, 0.0
  %184 = vadd.xlane.f32.xlu0 %v183
  %v185 = vpop.xlane.xlu0 %184
  %v186 = vsel %vm58, %v150, 0.0
  %187 = vadd.xlane.f32.xlu0 %v186
  %v188 = vpop.xlane.xlu0 %187
  %v189 = vsel %vm58, %v151, 0.0
  %190 = vadd.xlane.f32.xlu0 %v189
  %v191 = vpop.xlane.xlu0 %190
  %v192 = vsel %vm58, %v152, 0.0
  %193 = vadd.xlane.f32.xlu0 %v192
  %v194 = vpop.xlane.xlu0 %193
  %v195 = vsel %vm58, %v153, 0.0
  %196 = vadd.xlane.f32.xlu0 %v195
  %v197 = vpop.xlane.xlu0 %196
  %v198 = vsel %vm58, %v154, 0.0
  %199 = vadd.xlane.f32.xlu0 %v198
  %v200 = vpop.xlane.xlu0 %199
  %v201 = vsel %vm58, %v155, 0.0
  %202 = vadd.xlane.f32.xlu0 %v201
  %v203 = vpop.xlane.xlu0 %202
  %v204 = vmul.f32 %v158, %v107
  %v205 = vmul.f32 %v161, %v107
  %v206 = vmul.f32 %v164, %v107
  %v207 = vmul.f32 %v167, %v107
  %v208 = vmul.f32 %v170, %v107
  %v209 = vmul.f32 %v173, %v107
  %v210 = vmul.f32 %v176, %v107
  %v211 = vmul.f32 %v179, %v107
  %v212 = vmul.f32 %v182, %v107
  %v213 = vmul.f32 %v185, %v107
  %v214 = vmul.f32 %v188, %v107
  %v215 = vmul.f32 %v191, %v107
  %v216 = vmul.f32 %v194, %v107
  %v217 = vmul.f32 %v197, %v107
  %v218 = vmul.f32 %v200, %v107
  %v219 = vmul.f32 %v203, %v107
  %v220 = vadd.f32 %v204, 1e-05
  %v221 = vadd.f32 %v205, 1e-05
  %v222 = vadd.f32 %v206, 1e-05
  %v223 = vadd.f32 %v207, 1e-05
  %v224 = vadd.f32 %v208, 1e-05
  %v225 = vadd.f32 %v209, 1e-05
  %v226 = vadd.f32 %v210, 1e-05
  %v227 = vadd.f32 %v211, 1e-05
  %v228 = vadd.f32 %v212, 1e-05
  %v229 = vadd.f32 %v213, 1e-05
  %v230 = vadd.f32 %v214, 1e-05
  %v231 = vadd.f32 %v215, 1e-05
  %v232 = vadd.f32 %v216, 1e-05
  %v233 = vadd.f32 %v217, 1e-05
  %v234 = vadd.f32 %v218, 1e-05
  %v235 = vadd.f32 %v219, 1e-05
  %v236 = vrsqrt.pop %v220
  %v237 = vrsqrt.pop %v221
  %v238 = vrsqrt.pop %v222
  %v239 = vrsqrt.pop %v223
  %v240 = vrsqrt.pop %v224
  %v241 = vrsqrt.pop %v225
  %v242 = vrsqrt.pop %v226
  %v243 = vrsqrt.pop %v227
  %v244 = vrsqrt.pop %v228
  %v245 = vrsqrt.pop %v229
  %v246 = vrsqrt.pop %v230
  %v247 = vrsqrt.pop %v231
  %v248 = vrsqrt.pop %v232
  %v249 = vrsqrt.pop %v233
  %v250 = vrsqrt.pop %v234
  %v251 = vrsqrt.pop %v235
  %v252 = vmul.f32 %v124, %v236
  %v253 = vmul.f32 %v125, %v237
  %v254 = vmul.f32 %v126, %v238
  %v255 = vmul.f32 %v127, %v239
  %v256 = vmul.f32 %v128, %v240
  %v257 = vmul.f32 %v129, %v241
  %v258 = vmul.f32 %v130, %v242
  %v259 = vmul.f32 %v131, %v243
  %v260 = vmul.f32 %v132, %v244
  %v261 = vmul.f32 %v133, %v245
  %v262 = vmul.f32 %v134, %v246
  %v263 = vmul.f32 %v135, %v247
  %v264 = vmul.f32 %v136, %v248
  %v265 = vmul.f32 %v137, %v249
  %v266 = vmul.f32 %v138, %v250
  %v267 = vmul.f32 %v139, %v251
  %v268 = vld [vmem:[%s3] sm:$0x1]
  %v270 = vlaneseq
  %v271 = vshrl.u32 %v270, 7
  %v272 = vsub.s32 0, %v271
  %v273 = vrot.slane %v268, %v272
  %v275 = vmul.f32 %v252, %v273
  %v276 = vmul.f32 %v253, %v273
  %v277 = vmul.f32 %v254, %v273
  %v278 = vmul.f32 %v255, %v273
  %v279 = vmul.f32 %v256, %v273
  %v280 = vmul.f32 %v257, %v273
  %v281 = vmul.f32 %v258, %v273
  %v282 = vmul.f32 %v259, %v273
  %v283 = vmul.f32 %v260, %v273
  %v284 = vmul.f32 %v261, %v273
  %v285 = vmul.f32 %v262, %v273
  %v286 = vmul.f32 %v263, %v273
  %v287 = vmul.f32 %v264, %v273
  %v288 = vmul.f32 %v265, %v273
  %v289 = vmul.f32 %v266, %v273
  %v290 = vmul.f32 %v267, %v273
  %v291 = vld [vmem:[%s4] sm:$0x1]
  %v293 = vlaneseq
  %v294 = vshrl.u32 %v293, 7
  %v295 = vsub.s32 0, %v294
  %v296 = vrot.slane %v291, %v295
  %v298 = vadd.f32 %v275, %v296
  %v299 = vadd.f32 %v276, %v296
  %v300 = vadd.f32 %v277, %v296
  %v301 = vadd.f32 %v278, %v296
  %v302 = vadd.f32 %v279, %v296
  %v303 = vadd.f32 %v280, %v296
  %v304 = vadd.f32 %v281, %v296
  %v305 = vadd.f32 %v282, %v296
  %v306 = vadd.f32 %v283, %v296
  %v307 = vadd.f32 %v284, %v296
  %v308 = vadd.f32 %v285, %v296
  %v309 = vadd.f32 %v286, %v296
  %v310 = vadd.f32 %v287, %v296
  %v311 = vadd.f32 %v288, %v296
  %v312 = vadd.f32 %v289, %v296
  %v313 = vadd.f32 %v290, %v296
  %v314 = vpack.c.bf16 %v299, %v298
  %v315 = vpack.c.bf16 %v301, %v300
  %v316 = vpack.c.bf16 %v303, %v302
  %v317 = vpack.c.bf16 %v305, %v304
  %v318 = vpack.c.bf16 %v307, %v306
  %v319 = vpack.c.bf16 %v309, %v308
  %v320 = vpack.c.bf16 %v311, %v310
  %v321 = vpack.c.bf16 %v313, %v312
  %v322 = vld [vmem:[#allocation2] sm:$0xff]
  %v323 = vld [vmem:[#allocation2 + $0x8] sm:$0xff]
  %v324 = vld [vmem:[#allocation2 + $0x10] sm:$0xff]
  %v325 = vld [vmem:[#allocation2 + $0x18] sm:$0xff]
  %v326 = vld [vmem:[#allocation2 + $0x20] sm:$0xff]
  %v327 = vld [vmem:[#allocation2 + $0x28] sm:$0xff]
  %v328 = vld [vmem:[#allocation2 + $0x30] sm:$0xff]
  %v329 = vld [vmem:[#allocation2 + $0x38] sm:$0xff]
  %v330 = vld [vmem:[#allocation2 + $0x40] sm:$0xff]
  %v331 = vld [vmem:[#allocation2 + $0x48] sm:$0xff]
  %v332 = vld [vmem:[#allocation2 + $0x50] sm:$0xff]
  %v333 = vld [vmem:[#allocation2 + $0x58] sm:$0xff]
  %v334 = vld [vmem:[#allocation2 + $0x60] sm:$0xff]
  %v335 = vld [vmem:[#allocation2 + $0x68] sm:$0xff]
  %v336 = vld [vmem:[#allocation2 + $0x70] sm:$0xff]
  %v337 = vld [vmem:[#allocation2 + $0x78] sm:$0xff]
  %v338 = vld [vmem:[%s1] sm:$0xf]
  %v339 = vld [vmem:[%s1 + $0x4] sm:$0xf]
  %v340 = vld [vmem:[%s1 + $0x8] sm:$0xf]
  %v341 = vld [vmem:[%s1 + $0xc] sm:$0xf]
  %v346 = vunpack.c.l.b16 %v338
  %v347 = vunpack.c.l.b16 %v339
  %v348 = vunpack.c.l.b16 %v340
  %v349 = vunpack.c.l.b16 %v341
  %v350 = vpack.c.b16 %v347, %v346
  %v351 = vpack.c.b16 %v349, %v348
  %v355 = vsel %vm58, %v314, 0
  %v358 = vsel %vm58, %v315, 0
  %v361 = vsel %vm58, %v316, 0
  %v364 = vsel %vm58, %v317, 0
  %v367 = vsel %vm58, %v318, 0
  %v370 = vsel %vm58, %v319, 0
  %v373 = vsel %vm58, %v320, 0
  %v376 = vsel %vm58, %v321, 0
  %378 = vmatprep.subr.bf16.mxu0 0
  %379 = vmatpush1.bf16.msra.mxu0 0
  %380 = vmatprep.subr.bf16.mxu0 0
  %381 = vmatpush1.bf16.msra.mxu0 0
  %382 = vmatprep.subr.bf16.mxu0 0
  %383 = vmatpush1.bf16.msra.mxu0 0
  %384 = vmatprep.subr.bf16.mxu0 0
  %385 = vmatpush1.bf16.msra.mxu0 0
  %386 = vmatprep.subr.bf16.mxu0 0
  %387 = vmatpush1.bf16.msra.mxu0 0
  %388 = vmatprep.subr.bf16.mxu0 0
  %389 = vmatpush1.bf16.msra.mxu0 0
  %390 = vmatprep.subr.bf16.mxu0 0
  %391 = vmatpush1.bf16.msra.mxu0 %v351
  %392 = vmatprep.subr.bf16.mxu0 0
  %393 = vmatpush1.bf16.msra.mxu0 %v350
  %394 = vmatprep.subr.bf16.mxu0 0
  %395 = vmatpush2.bf16.msra.mxu0 0
  %396 = vmatprep.subr.bf16.mxu0 0
  %397 = vmatpush2.bf16.msra.mxu0 0
  %398 = vmatprep.subr.bf16.mxu0 0
  %399 = vmatpush2.bf16.msra.mxu0 0
  %400 = vmatprep.subr.bf16.mxu0 0
  %401 = vmatpush2.bf16.msra.mxu0 0
  %402 = vmatprep.subr.bf16.mxu0 0
  %403 = vmatpush2.bf16.msra.mxu0 0
  %404 = vmatprep.subr.bf16.mxu0 0
  %405 = vmatpush2.bf16.msra.mxu0 0
  %406 = vmatprep.subr.bf16.mxu0 0
  %407 = vmatpush2.bf16.msra.mxu0 0
  %408 = vmatprep.subr.bf16.mxu0 0
  %409 = vmatpush2.bf16.msra.mxu0 0
  %410 = vmatprep.mubr.bf16.mxu0 0
  %411 = vmatmul.mubr.bf16.gmra.mxu0 %v355
  %v412 = vpop.f32.mrf.mxu0
  %v413 = vadd.f32 0.0, %v412
  %v414 = vpop.f32.mrf.mxu0
  %v415 = vpop.f32.mrf.mxu0
  %v416 = vadd.f32 0.0, %v415
  %v417 = vpop.f32.mrf.mxu0
  %418 = vmatprep.mubr.bf16.mxu0 0
  %419 = vmatmul.mubr.bf16.gmra.mxu0 %v358
  %v420 = vpop.f32.mrf.mxu0
  %v421 = vadd.f32 0.0, %v420
  %v422 = vpop.f32.mrf.mxu0
  %v423 = vpop.f32.mrf.mxu0
  %v424 = vadd.f32 0.0, %v423
  %v425 = vpop.f32.mrf.mxu0
  %426 = vmatprep.mubr.bf16.mxu0 0
  %427 = vmatmul.mubr.bf16.gmra.mxu0 %v361
  %v428 = vpop.f32.mrf.mxu0
  %v429 = vadd.f32 0.0, %v428
  %v430 = vpop.f32.mrf.mxu0
  %v431 = vpop.f32.mrf.mxu0
  %v432 = vadd.f32 0.0, %v431
  %v433 = vpop.f32.mrf.mxu0
  %434 = vmatprep.mubr.bf16.mxu0 0
  %435 = vmatmul.mubr.bf16.gmra.mxu0 %v364
  %v436 = vpop.f32.mrf.mxu0
  %v437 = vadd.f32 0.0, %v436
  %v438 = vpop.f32.mrf.mxu0
  %v439 = vpop.f32.mrf.mxu0
  %v440 = vadd.f32 0.0, %v439
  %v441 = vpop.f32.mrf.mxu0
  %442 = vmatprep.mubr.bf16.mxu0 0
  %443 = vmatmul.mubr.bf16.gmra.mxu0 %v367
  %v444 = vpop.f32.mrf.mxu0
  %v445 = vadd.f32 0.0, %v444
  %v446 = vpop.f32.mrf.mxu0
  %v447 = vpop.f32.mrf.mxu0
  %v448 = vadd.f32 0.0, %v447
  %v449 = vpop.f32.mrf.mxu0
  %450 = vmatprep.mubr.bf16.mxu0 0
  %451 = vmatmul.mubr.bf16.gmra.mxu0 %v370
  %v452 = vpop.f32.mrf.mxu0
  %v453 = vadd.f32 0.0, %v452
  %v454 = vpop.f32.mrf.mxu0
  %v455 = vpop.f32.mrf.mxu0
  %v456 = vadd.f32 0.0, %v455
  %v457 = vpop.f32.mrf.mxu0
  %458 = vmatprep.mubr.bf16.mxu0 0
  %459 = vmatmul.mubr.bf16.gmra.mxu0 %v373
  %v460 = vpop.f32.mrf.mxu0
  %v461 = vadd.f32 0.0, %v460
  %v462 = vpop.f32.mrf.mxu0
  %v463 = vpop.f32.mrf.mxu0
  %v464 = vadd.f32 0.0, %v463
  %v465 = vpop.f32.mrf.mxu0
  %466 = vmatprep.mubr.bf16.mxu0 0
  %467 = vmatmul.mubr.bf16.gmra.mxu0 %v376
  %v468 = vpop.f32.mrf.mxu0
  %v469 = vadd.f32 0.0, %v468
  %v470 = vpop.f32.mrf.mxu0
  %v471 = vpop.f32.mrf.mxu0
  %v472 = vadd.f32 0.0, %v471
  %v473 = vpop.f32.mrf.mxu0
  %474 = vdwg.mxu0
  %v475 = vadd.f32 %v322, %v413
  %v476 = vadd.f32 %v323, %v416
  %v477 = vadd.f32 %v324, %v421
  %v478 = vadd.f32 %v325, %v424
  %v479 = vadd.f32 %v326, %v429
  %v480 = vadd.f32 %v327, %v432
  %v481 = vadd.f32 %v328, %v437
  %v482 = vadd.f32 %v329, %v440
  %v483 = vadd.f32 %v330, %v445
  %v484 = vadd.f32 %v331, %v448
  %v485 = vadd.f32 %v332, %v453
  %v486 = vadd.f32 %v333, %v456
  %v487 = vadd.f32 %v334, %v461
  %v488 = vadd.f32 %v335, %v464
  %v489 = vadd.f32 %v336, %v469
  %v490 = vadd.f32 %v337, %v472
  %vm491 = vcmask 785408
  %492 = vst.msk [vmem:[#allocation2] sm:$0xff] %vm491, %v475
  %493 = vst.msk [vmem:[#allocation2 + $0x8] sm:$0xff] %vm491, %v476
  %494 = vst.msk [vmem:[#allocation2 + $0x10] sm:$0xff] %vm491, %v477
  %495 = vst.msk [vmem:[#allocation2 + $0x18] sm:$0xff] %vm491, %v478
  %496 = vst.msk [vmem:[#allocation2 + $0x20] sm:$0xff] %vm491, %v479
  %497 = vst.msk [vmem:[#allocation2 + $0x28] sm:$0xff] %vm491, %v480
  %498 = vst.msk [vmem:[#allocation2 + $0x30] sm:$0xff] %vm491, %v481
  %499 = vst.msk [vmem:[#allocation2 + $0x38] sm:$0xff] %vm491, %v482
  %500 = vst.msk [vmem:[#allocation2 + $0x40] sm:$0xff] %vm491, %v483
  %501 = vst.msk [vmem:[#allocation2 + $0x48] sm:$0xff] %vm491, %v484
  %502 = vst.msk [vmem:[#allocation2 + $0x50] sm:$0xff] %vm491, %v485
  %503 = vst.msk [vmem:[#allocation2 + $0x58] sm:$0xff] %vm491, %v486
  %504 = vst.msk [vmem:[#allocation2 + $0x60] sm:$0xff] %vm491, %v487
  %505 = vst.msk [vmem:[#allocation2 + $0x68] sm:$0xff] %vm491, %v488
  %506 = vst.msk [vmem:[#allocation2 + $0x70] sm:$0xff] %vm491, %v489
  %507 = vst.msk [vmem:[#allocation2 + $0x78] sm:$0xff] %vm491, %v490
  // Predicated region
  $region26: #{tpu_custom_call.1} parent=0 // pred_check
    %p508 = pneg %p21
  $region27: #{tpu_custom_call.1} parent=0 // pred_check_branch
    %510 = sbr.rel (%p508) target = $region29
  $region28: #{tpu_custom_call.1} parent=0 // pred_region
    %v511 = vld [vmem:[#allocation2] sm:$0xff]
    %v512 = vld [vmem:[#allocation2 + $0x8] sm:$0xff]
    %v513 = vld [vmem:[#allocation2 + $0x10] sm:$0xff]
    %v514 = vld [vmem:[#allocation2 + $0x18] sm:$0xff]
    %v515 = vld [vmem:[#allocation2 + $0x20] sm:$0xff]
    %v516 = vld [vmem:[#allocation2 + $0x28] sm:$0xff]
    %v517 = vld [vmem:[#allocation2 + $0x30] sm:$0xff]
    %v518 = vld [vmem:[#allocation2 + $0x38] sm:$0xff]
    %v519 = vld [vmem:[#allocation2 + $0x40] sm:$0xff]
    %v520 = vld [vmem:[#allocation2 + $0x48] sm:$0xff]
    %v521 = vld [vmem:[#allocation2 + $0x50] sm:$0xff]
    %v522 = vld [vmem:[#allocation2 + $0x58] sm:$0xff]
    %v523 = vld [vmem:[#allocation2 + $0x60] sm:$0xff]
    %v524 = vld [vmem:[#allocation2 + $0x68] sm:$0xff]
    %v525 = vld [vmem:[#allocation2 + $0x70] sm:$0xff]
    %v526 = vld [vmem:[#allocation2 + $0x78] sm:$0xff]
    %v527 = vld [vmem:[%s2] sm:$0x1]
    %v529 = vlaneseq
    %v530 = vshrl.u32 %v529, 7
    %v531 = vsub.s32 0, %v530
    %v532 = vrot.slane %v527, %v531
    %v534 = vadd.f32 %v511, %v532
    %v535 = vadd.f32 %v512, %v532
    %v536 = vadd.f32 %v513, %v532
    %v537 = vadd.f32 %v514, %v532
    %v538 = vadd.f32 %v515, %v532
    %v539 = vadd.f32 %v516, %v532
    %v540 = vadd.f32 %v517, %v532
    %v541 = vadd.f32 %v518, %v532
    %v542 = vadd.f32 %v519, %v532
    %v543 = vadd.f32 %v520, %v532
    %v544 = vadd.f32 %v521, %v532
    %v545 = vadd.f32 %v522, %v532
    %v546 = vadd.f32 %v523, %v532
    %v547 = vadd.f32 %v524, %v532
    %v548 = vadd.f32 %v525, %v532
    %v549 = vadd.f32 %v526, %v532
    %v550 = vpack.c.bf16 %v535, %v534
    %v551 = vpack.c.bf16 %v537, %v536
    %v552 = vpack.c.bf16 %v539, %v538
    %v553 = vpack.c.bf16 %v541, %v540
    %v554 = vpack.c.bf16 %v543, %v542
    %v555 = vpack.c.bf16 %v545, %v544
    %v556 = vpack.c.bf16 %v547, %v546
    %v557 = vpack.c.bf16 %v549, %v548
    %v566 = vunpack.c.l.b16 %v550
    %v567 = vunpack.c.h.b16 %v550
    %v568 = vunpack.c.l.b16 %v551
    %v569 = vunpack.c.h.b16 %v551
    %v570 = vunpack.c.l.b16 %v552
    %v571 = vunpack.c.h.b16 %v552
    %v572 = vunpack.c.l.b16 %v553
    %v573 = vunpack.c.h.b16 %v553
    %v574 = vunpack.c.l.b16 %v554
    %v575 = vunpack.c.h.b16 %v554
    %v576 = vunpack.c.l.b16 %v555
    %v577 = vunpack.c.h.b16 %v555
    %v578 = vunpack.c.l.b16 %v556
    %v579 = vunpack.c.h.b16 %v556
    %v580 = vunpack.c.l.b16 %v557
    %v581 = vunpack.c.h.b16 %v557
    %v582 = vpack.c.b16 %v566, %v566
    %v583 = vpack.c.b16 %v567, %v567
    %v584 = vpack.c.b16 %v568, %v568
    %v585 = vpack.c.b16 %v569, %v569
    %v586 = vpack.c.b16 %v570, %v570
    %v587 = vpack.c.b16 %v571, %v571
    %v588 = vpack.c.b16 %v572, %v572
    %v589 = vpack.c.b16 %v573, %v573
    %v590 = vpack.c.b16 %v574, %v574
    %v591 = vpack.c.b16 %v575, %v575
    %v592 = vpack.c.b16 %v576, %v576
    %v593 = vpack.c.b16 %v577, %v577
    %v594 = vpack.c.b16 %v578, %v578
    %v595 = vpack.c.b16 %v579, %v579
    %v596 = vpack.c.b16 %v580, %v580
    %v597 = vpack.c.b16 %v581, %v581
    %vm614 = vcmask 781312
    %615 = vst.msk [vmem:[%s5] sm:$0xf] %vm614, %v582
    %616 = vst.msk [vmem:[%s5 + $0x4] sm:$0xf] %vm614, %v583
    %617 = vst.msk [vmem:[%s5 + $0x8] sm:$0xf] %vm614, %v584
    %618 = vst.msk [vmem:[%s5 + $0xc] sm:$0xf] %vm614, %v585
    %619 = vst.msk [vmem:[%s5 + $0x10] sm:$0xf] %vm614, %v586
    %620 = vst.msk [vmem:[%s5 + $0x14] sm:$0xf] %vm614, %v587
    %621 = vst.msk [vmem:[%s5 + $0x18] sm:$0xf] %vm614, %v588
    %622 = vst.msk [vmem:[%s5 + $0x1c] sm:$0xf] %vm614, %v589
    %623 = vst.msk [vmem:[%s5 + $0x20] sm:$0xf] %vm614, %v590
    %624 = vst.msk [vmem:[%s5 + $0x24] sm:$0xf] %vm614, %v591
    %625 = vst.msk [vmem:[%s5 + $0x28] sm:$0xf] %vm614, %v592
    %626 = vst.msk [vmem:[%s5 + $0x2c] sm:$0xf] %vm614, %v593
    %627 = vst.msk [vmem:[%s5 + $0x30] sm:$0xf] %vm614, %v594
    %628 = vst.msk [vmem:[%s5 + $0x34] sm:$0xf] %vm614, %v595
    %629 = vst.msk [vmem:[%s5 + $0x38] sm:$0xf] %vm614, %v596
    %630 = vst.msk [vmem:[%s5 + $0x3c] sm:$0xf] %vm614, %v597
  $region29: #{tpu_custom_call.1} parent=0 // pred_fallthru
    _
  // Predicated region
  $region30: #{tpu_custom_call.1} parent=0 // pred_check
    _
  $region31: #{tpu_custom_call.1} parent=0 // pred_check_branch
    %632 = sbr.rel (0) target = $region33
  $region32: #{tpu_custom_call.1} parent=0 // pred_region
    _
  $region33: #{tpu_custom_call.1} parent=0 // pred_fallthru
    _
  // Predicated region
  $region34: #{tpu_custom_call.1} parent=0 // pred_check
    _
  $region35: #{tpu_custom_call.1} parent=0 // pred_check_branch
    %634 = sbr.rel (0) target = $region37
  $region36: #{tpu_custom_call.1} parent=0 // pred_region
    _
  $region37: #{tpu_custom_call.1} parent=0 // pred_fallthru
    _

</llo_original>
